<compile_context>
chip_gen: v6e
topology: v6e:2x2x1
jax: 0.10.0
libtpu: 0.0.40
codegen_flags: <defaults>
</compile_context>

<pallas_src>
import functools

import jax
import jax.numpy as jnp
from jax.experimental import pallas as pl
from jax.experimental.pallas import tpu as pltpu


def _round_up(x, m):
    return (x + m - 1) // m * m


def _cdiv(a, b):
    return -(-a // b)


def adv_net_kernel(x_ref, w1_ref, b1_ref, w2_ref, b2_ref, w3_ref, b3_ref, y_ref):
    """Fused 3-layer MLP on one (tile_b, in_f) batch tile.

    MXU matmuls accumulate in f32; bias-add + ReLU run in f32 (biases are f32 refs);
    values are downcast only to feed the next matmul.  Dropout == identity (eval)."""
    x = x_ref[...]

    h1 = jnp.dot(x, w1_ref[...], preferred_element_type=jnp.float32)
    h1 = jnp.maximum(h1 + b1_ref[...], 0.0)                      # relu1 (dropout1 = id)

    h2 = jnp.dot(h1.astype(w2_ref.dtype), w2_ref[...],
                 preferred_element_type=jnp.float32)
    h2 = jnp.maximum(h2 + b2_ref[...], 0.0)                      # relu2 (dropout2 = id)

    y = jnp.dot(h2.astype(w3_ref.dtype), w3_ref[...],
                preferred_element_type=jnp.float32)
    y_ref[...] = (y + b3_ref[...]).astype(y_ref.dtype)           # narrow (multi-wide) store


def prepare_params(w1, b1, w2, b2, w3, b3, *, compute_dtype=None):
    """One-time parameter prep (hoisted out of the per-call wrapper).

    w*: [in, out] (transposed from PyTorch's [out, in]); b*: [1, out].
    Only the hidden dim is zero-padded (to a multiple of 128); the input-feature and
    output (multi) dims are left at their true sizes.  Biases are kept in f32."""
    cdt = jnp.dtype(compute_dtype) if compute_dtype is not None else jnp.dtype(w1.dtype)
    in_f, H = w1.shape
    multi = w3.shape[1]
    h_p = _round_up(H, 128)

    w1p = jnp.zeros((in_f, h_p), cdt).at[:, :H].set(w1.astype(cdt))
    b1p = jnp.zeros((1, h_p), jnp.float32).at[:, :H].set(b1.astype(jnp.float32))
    w2p = jnp.zeros((h_p, h_p), cdt).at[:H, :H].set(w2.astype(cdt))
    b2p = jnp.zeros((1, h_p), jnp.float32).at[:, :H].set(b2.astype(jnp.float32))
    w3p = jnp.zeros((h_p, multi), cdt).at[:H, :].set(w3.astype(cdt))
    b3p = jnp.reshape(b3, (1, multi)).astype(jnp.float32)
    return (w1p, b1p, w2p, b2p, w3p, b3p)


def _vmem_capacity_bytes():
    try:
        info = pltpu.get_tpu_info()
        cap = getattr(info, "vmem_capacity_bytes", None)
        if cap:
            return int(cap)
    except Exception:
        pass
    return 64 * 1024 * 1024  # conservative (v7x physical)


def adversarial_network_forward(x, params, *, tile_b=None, vmem_budget_bytes=None):
    """x: [B, in_feature]; params: output of prepare_params(). Returns y: [B, multi]."""
    w1p, b1p, w2p, b2p, w3p, b3p = params
    B, in_f = x.shape
    assert w1p.shape[0] == in_f, (w1p.shape, in_f)
    h_p = w1p.shape[1]
    multi = w3p.shape[1]
    cdt = w1p.dtype
    out_dtype = x.dtype

    # Explicit choice: feed the MXU in the parameter compute dtype (bf16 on v6e/v7x).
    x = x.astype(cdt)

    if vmem_budget_bytes is None:
        # v5e/v6e: 128 MiB physical -> 64 MiB budget; v7x: 64 MiB -> 32 MiB budget.
        vmem_budget_bytes = min(_vmem_capacity_bytes() // 2, 96 * 1024 * 1024)

    itemsize = jnp.dtype(cdt).itemsize
    out_itemsize = jnp.dtype(out_dtype).itemsize
    # Weights/biases counted double-buffered (conservative); biases are f32.
    w_bytes = 2 * ((in_f * h_p + h_p * h_p + h_p * multi) * itemsize
                   + (2 * h_p + multi) * 4)

    def tile_bytes(tb):
        io = 2 * tb * in_f * itemsize + 2 * tb * multi * out_itemsize  # dbl-buffered x, y
        mid = 2 * tb * h_p * 4                                         # f32 h1/h2 live values
        return io + mid

    if tile_b is None:
        tile_b = min(1024, _round_up(B, 8))
        if B >= 256:
            # Keep >= 2 grid steps so v7x's second TensorCore gets work (harmless on 1-TC chips).
            tile_b = min(tile_b, _round_up(_cdiv(B, 2), 8))
        while tile_b > 8 and w_bytes + tile_bytes(tile_b) > vmem_budget_bytes:
            tile_b //= 2
    tile_b = max(8, _round_up(int(tile_b), 8))
    # TODO(synk): if w_bytes alone exceeds the VMEM budget (very large in_feature/hidden,
    # esp. on v7x), fall back to tiling the reduction dims over an extra 'arbitrary' axis.

    grid = (_cdiv(B, tile_b),)

    footprint = w_bytes + tile_bytes(tile_b)
    vmem_limit = max(int(1.5 * footprint) + (4 << 20), 16 << 20)
    vmem_limit = min(vmem_limit, max(vmem_budget_bytes, 16 << 20) + (8 << 20))

    flops = 2 * B * (in_f * h_p + h_p * h_p + h_p * multi)
    bytes_accessed = (B * in_f * itemsize + B * multi * out_itemsize
                      + (in_f * h_p + h_p * h_p + h_p * multi) * itemsize
                      + (2 * h_p + multi) * 4)

    const2 = lambda i: (0, 0)

    y = pl.pallas_call(
        adv_net_kernel,
        out_shape=jax.ShapeDtypeStruct((B, multi), out_dtype),
        grid=grid,
        in_specs=[
            pl.BlockSpec((tile_b, in_f), lambda i: (i, 0)),   # x: batch-tiled, unpadded lanes
            pl.BlockSpec((in_f, h_p), const2),                # weights/biases: VMEM-resident
            pl.BlockSpec((1, h_p), const2),
            pl.BlockSpec((h_p, h_p), const2),
            pl.BlockSpec((1, h_p), const2),
            pl.BlockSpec((h_p, multi), const2),
            pl.BlockSpec((1, multi), const2),
        ],
        out_specs=pl.BlockSpec((tile_b, multi), lambda i: (i, 0)),
        compiler_params=pltpu.CompilerParams(
            dimension_semantics=("parallel",),                # v7x: shard batch tiles over TCs
            vmem_limit_bytes=int(vmem_limit),
        ),
        cost_estimate=pl.CostEstimate(
            flops=int(flops), transcendentals=0, bytes_accessed=int(bytes_accessed)),
    )(x, w1p, b1p, w2p, b2p, w3p, b3p)
    return y


def init_adversarial_network_params(key, in_feature, hidden_size, multi=1,
                                    dtype=jnp.float32):
    """Matches init_weights(): kaiming_normal_ weights, zero biases.
    PyTorch Linear weight is [out, in]; we store the transpose [in, out] for the kernel."""
    k1, k2, k3 = jax.random.split(key, 3)

    def kaiming_normal_t(k, fan_in, fan_out):
        # kaiming_normal_(mode='fan_in', nonlinearity='leaky_relu', a=0): std = sqrt(2/fan_in)
        std = (2.0 / fan_in) ** 0.5
        w = jax.random.normal(k, (fan_out, fan_in), dtype=dtype) * std  # torch layout
        return w.T  # -> [in, out]

    w1 = kaiming_normal_t(k1, in_feature, hidden_size)
    b1 = jnp.zeros((1, hidden_size), dtype=dtype)
    w2 = kaiming_normal_t(k2, hidden_size, hidden_size)
    b2 = jnp.zeros((1, hidden_size), dtype=dtype)
    w3 = kaiming_normal_t(k3, hidden_size, multi)
    b3 = jnp.zeros((1, multi), dtype=dtype)
    return w1, b1, w2, b2, w3, b3


def reference_forward(x, w1, b1, w2, b2, w3, b3):
    h1 = jnp.maximum(x @ w1 + b1, 0.0)
    h2 = jnp.maximum(h1 @ w2 + b2, 0.0)
    return h2 @ w3 + b3


if __name__ == "__main__":
    key = jax.random.PRNGKey(0)
    kx, kxl, kp = jax.random.split(key, 3)

    batch, in_feature, hidden_size, multi = 8, 32, 32, 1

    x = jax.random.normal(kx, (batch, in_feature), dtype=jnp.float32)
    params = init_adversarial_network_params(kp, in_feature, hidden_size, multi)
    y_ref = reference_forward(x, *params)

    fwd = jax.jit(adversarial_network_forward)

    # 1) f32 run (tight numerical check).
    prep_f32 = prepare_params(*params, compute_dtype=jnp.float32)
    y = jax.block_until_ready(fwd(x, prep_f32))
    assert y.shape == (batch, multi), y.shape
    assert jnp.allclose(y, y_ref, atol=1e-5, rtol=1e-5), \
        f"f32 max abs err {jnp.max(jnp.abs(y - y_ref))}"

    # 2) bf16 run (MXU-native operands on v6e/v7x), loose check vs f32 reference.
    prep_bf16 = prepare_params(*params, compute_dtype=jnp.bfloat16)
    yb = jax.block_until_ready(fwd(x.astype(jnp.bfloat16), prep_bf16))
    assert yb.shape == (batch, multi), yb.shape
    assert jnp.allclose(yb.astype(jnp.float32), y_ref, atol=0.2, rtol=0.1), \
        f"bf16 max abs err {jnp.max(jnp.abs(yb.astype(jnp.float32) - y_ref))}"

    # 3) Larger odd-sized bf16 batch with an explicit multi-step grid (exercises batch
    #    tiling, the 'parallel' axis, a partial last block, and pipelined x/y DMAs).
    big_b = 250
    xl = jax.random.normal(kxl, (big_b, in_feature), dtype=jnp.float32)
    yl_ref = reference_forward(xl, *params)
    fwd_tiled = jax.jit(functools.partial(adversarial_network_forward, tile_b=64))
    yl = jax.block_until_ready(fwd_tiled(xl.astype(jnp.bfloat16), prep_bf16))
    assert yl.shape == (big_b, multi), yl.shape
    assert jnp.allclose(yl.astype(jnp.float32), yl_ref, atol=0.2, rtol=0.1), \
        f"tiled bf16 max abs err {jnp.max(jnp.abs(yl.astype(jnp.float32) - yl_ref))}"

    print("KERNEL_OK")
</pallas_src>

<mosaic_0001>
module attributes {stable_mosaic.version = 11 : i64} {
  func.func @adv_net_kernel(%arg0: i32, %arg1: memref<8x32xf32, #tpu.memory_space<vmem>>, %arg2: memref<32x128xf32, #tpu.memory_space<vmem>>, %arg3: memref<1x128xf32, #tpu.memory_space<vmem>>, %arg4: memref<128x128xf32, #tpu.memory_space<vmem>>, %arg5: memref<1x128xf32, #tpu.memory_space<vmem>>, %arg6: memref<128x1xf32, #tpu.memory_space<vmem>>, %arg7: memref<1x1xf32, #tpu.memory_space<vmem>>, %arg8: memref<8x1xf32, #tpu.memory_space<vmem>>) attributes {dimension_semantics = [#tpu.dimension_semantics<parallel>], iteration_bounds = array<i64: 1>, scalar_prefetch = 0 : i64, scratch_operands = 0 : i64, tpu.core_type = #tpu.core_type<tc>, window_params = [{transform_indices = @transform_0, window_bounds = array<i64: 8, 32>}, {pipeline_mode = #tpu.pipeline_mode<synchronous>, transform_indices = @transform_1, window_bounds = array<i64: 32, 128>}, {pipeline_mode = #tpu.pipeline_mode<synchronous>, transform_indices = @transform_2, window_bounds = array<i64: 1, 128>}, {pipeline_mode = #tpu.pipeline_mode<synchronous>, transform_indices = @transform_3, window_bounds = array<i64: 128, 128>}, {pipeline_mode = #tpu.pipeline_mode<synchronous>, transform_indices = @transform_4, window_bounds = array<i64: 1, 128>}, {pipeline_mode = #tpu.pipeline_mode<synchronous>, transform_indices = @transform_5, window_bounds = array<i64: 128, 1>}, {pipeline_mode = #tpu.pipeline_mode<synchronous>, transform_indices = @transform_6, window_bounds = array<i64: 1, 1>}, {transform_indices = @transform_7, window_bounds = array<i64: 8, 1>}]} {
    %c0 = arith.constant 0 : index
    %c0_0 = arith.constant 0 : index
    %0 = vector.load %arg1[%c0, %c0_0] : memref<8x32xf32, #tpu.memory_space<vmem>>, vector<8x32xf32>
    %c0_1 = arith.constant 0 : index
    %c0_2 = arith.constant 0 : index
    %1 = vector.load %arg2[%c0_1, %c0_2] : memref<32x128xf32, #tpu.memory_space<vmem>>, vector<32x128xf32>
    %cst = arith.constant dense<0.000000e+00> : vector<8x128xf32>
    %2 = tpu.matmul %0, %1, %cst {dimension_numbers = #tpu.dot_dimension_numbers<[1], [0], [0], [1], [0, 0, 1, 1], [], []>} : vector<8x32xf32>, vector<32x128xf32>, vector<8x128xf32> -> vector<8x128xf32>
    %c0_3 = arith.constant 0 : index
    %c0_4 = arith.constant 0 : index
    %3 = vector.load %arg3[%c0_3, %c0_4] : memref<1x128xf32, #tpu.memory_space<vmem>>, vector<1x128xf32>
    %4 = vector.broadcast %3 : vector<1x128xf32> to vector<8x128xf32>
    %5 = arith.addf %2, %4 : vector<8x128xf32>
    %cst_5 = arith.constant 0.000000e+00 : f32
    %6 = vector.broadcast %cst_5 : f32 to vector<8x128xf32>
    %7 = arith.maximumf %5, %6 : vector<8x128xf32>
    %c0_6 = arith.constant 0 : index
    %c0_7 = arith.constant 0 : index
    %8 = vector.load %arg4[%c0_6, %c0_7] : memref<128x128xf32, #tpu.memory_space<vmem>>, vector<128x128xf32>
    %cst_8 = arith.constant dense<0.000000e+00> : vector<8x128xf32>
    %9 = tpu.matmul %7, %8, %cst_8 {dimension_numbers = #tpu.dot_dimension_numbers<[1], [0], [0], [1], [0, 0, 1, 1], [], []>} : vector<8x128xf32>, vector<128x128xf32>, vector<8x128xf32> -> vector<8x128xf32>
    %c0_9 = arith.constant 0 : index
    %c0_10 = arith.constant 0 : index
    %10 = vector.load %arg5[%c0_9, %c0_10] : memref<1x128xf32, #tpu.memory_space<vmem>>, vector<1x128xf32>
    %11 = vector.broadcast %10 : vector<1x128xf32> to vector<8x128xf32>
    %12 = arith.addf %9, %11 : vector<8x128xf32>
    %cst_11 = arith.constant 0.000000e+00 : f32
    %13 = vector.broadcast %cst_11 : f32 to vector<8x128xf32>
    %14 = arith.maximumf %12, %13 : vector<8x128xf32>
    %c0_12 = arith.constant 0 : index
    %c0_13 = arith.constant 0 : index
    %15 = vector.load %arg6[%c0_12, %c0_13] : memref<128x1xf32, #tpu.memory_space<vmem>>, vector<128x1xf32>
    %cst_14 = arith.constant dense<0.000000e+00> : vector<8x1xf32>
    %16 = tpu.matmul %14, %15, %cst_14 {dimension_numbers = #tpu.dot_dimension_numbers<[1], [0], [0], [1], [0, 0, 1, 1], [], []>} : vector<8x128xf32>, vector<128x1xf32>, vector<8x1xf32> -> vector<8x1xf32>
    %c0_15 = arith.constant 0 : index
    %c0_16 = arith.constant 0 : index
    %17 = vector.load %arg7[%c0_15, %c0_16] : memref<1x1xf32, #tpu.memory_space<vmem>>, vector<1x1xf32>
    %18 = vector.broadcast %17 : vector<1x1xf32> to vector<8x1xf32>
    %19 = arith.addf %16, %18 : vector<8x1xf32>
    %c0_17 = arith.constant 0 : index
    %c0_18 = arith.constant 0 : index
    %20 = vector.load %arg8[%c0_17, %c0_18] : memref<8x1xf32, #tpu.memory_space<vmem>>, vector<8x1xf32>
    tpu.vector_store %arg8[%c0_17, %c0_18], %19 {strides = array<i32>} : memref<8x1xf32, #tpu.memory_space<vmem>>, vector<8x1xf32>,
    return
  }
  func.func @transform_0(%arg0: i32) -> (i32, i32) {
    %c0_i32 = arith.constant 0 : i32
    %c0_i32_0 = arith.constant 0 : i32
    return %arg0, %c0_i32 : i32, i32
  }
  func.func @transform_1(%arg0: i32) -> (i32, i32) {
    %c0_i32 = arith.constant 0 : i32
    %c0_i32_0 = arith.constant 0 : i32
    %c0_i32_1 = arith.constant 0 : i32
    return %c0_i32, %c0_i32_0 : i32, i32
  }
  func.func @transform_2(%arg0: i32) -> (i32, i32) {
    %c0_i32 = arith.constant 0 : i32
    %c0_i32_0 = arith.constant 0 : i32
    %c0_i32_1 = arith.constant 0 : i32
    return %c0_i32, %c0_i32_0 : i32, i32
  }
  func.func @transform_3(%arg0: i32) -> (i32, i32) {
    %c0_i32 = arith.constant 0 : i32
    %c0_i32_0 = arith.constant 0 : i32
    %c0_i32_1 = arith.constant 0 : i32
    return %c0_i32, %c0_i32_0 : i32, i32
  }
  func.func @transform_4(%arg0: i32) -> (i32, i32) {
    %c0_i32 = arith.constant 0 : i32
    %c0_i32_0 = arith.constant 0 : i32
    %c0_i32_1 = arith.constant 0 : i32
    return %c0_i32, %c0_i32_0 : i32, i32
  }
  func.func @transform_5(%arg0: i32) -> (i32, i32) {
    %c0_i32 = arith.constant 0 : i32
    %c0_i32_0 = arith.constant 0 : i32
    %c0_i32_1 = arith.constant 0 : i32
    return %c0_i32, %c0_i32_0 : i32, i32
  }
  func.func @transform_6(%arg0: i32) -> (i32, i32) {
    %c0_i32 = arith.constant 0 : i32
    %c0_i32_0 = arith.constant 0 : i32
    %c0_i32_1 = arith.constant 0 : i32
    return %c0_i32, %c0_i32_0 : i32, i32
  }
  func.func @transform_7(%arg0: i32) -> (i32, i32) {
    %c0_i32 = arith.constant 0 : i32
    %c0_i32_0 = arith.constant 0 : i32
    return %arg0, %c0_i32 : i32, i32
  }
}

</mosaic_0001>

<llo_original>
// kernel: adversarial_network_forward.1
$region0: #{adversarial_network_forward.1}
  #allocation0 [shape = 'u32[]', space=smem, size = 0x4, offset = 0x4, fixed_abs, tag = 'smem constant byte address 0x4 - core index']
  #allocation1 [shape = 'u32[144,128]{1,0:T(1,128)}', space=vmem, size = 0x12000, scoped, tag = 'internal scratch']
  #allocation2 [shape = 'f32[1,1]{1,0:T(1,128)S(1)}', space=vmem, size = 0x200, scoped, tag = 'scoped memory for adversarial_network_forward.1']
  %s0 = inlined_call_operand.vmem [shape: f32[8,32], index: 0, kind: input, shape index: {}]
  %s1 = inlined_call_operand.hbm [shape: f32[32,128], index: 1, kind: input, shape index: {}]
  %s2 = inlined_call_operand.hbm [shape: f32[1,128], index: 2, kind: input, shape index: {}]
  %s3 = inlined_call_operand.vmem [shape: f32[128,128], index: 3, kind: input, shape index: {}]
  %s4 = inlined_call_operand.vmem [shape: f32[1,128], index: 4, kind: input, shape index: {}]
  %s5 = inlined_call_operand.vmem [shape: f32[128,1], index: 5, kind: input, shape index: {}]
  %s6 = inlined_call_operand.<no memory space> [shape: f32[1,1], index: 6, kind: input, shape index: {}]
  %s7 = inlined_call_operand.vmem [shape: f32[8,1], index: 7, kind: output, shape index: {}]
  %s8 = sld [smem:[#allocation0]]
  $region46: #{adversarial_network_forward.1} parent=0
    _
  %s10 = ssub.s32 1, %s8
  %s11 = scalar_select 0, %s10, %s8
  %v12 = vstv %s6
  %13 = vst [vmem:[#allocation2] sm:$0x1] %v12
  $region1: #{adversarial_network_forward.1} parent=0
    #allocation3 [shape = 'u8[16384]{0}', space=vmem, size = 0x4000, scoped, tag = 'input window, operand 1, single buffered']
    #allocation4 [shape = 's32[1]{0}', space=sflag, size = 0x4, scoped, tag = 'scoped memory for adversarial_network_forward.1']
    #allocation5 [shape = 'u8[512]{0}', space=vmem, size = 0x400, scoped, tag = 'input window, operand 2, single buffered']
    #allocation6 [shape = 's32[1]{0}', space=sflag, size = 0x4, scoped, tag = 'scoped memory for adversarial_network_forward.1']
    %14 = vsyncpa [#allocation4], 0
    %15 = vsyncpa [#allocation6], 0
    // Predicated region
    $region2: #{adversarial_network_forward.1} parent=1 // pred_check
      _
    $region3: #{adversarial_network_forward.1} parent=1 // pred_check_branch
      %17 = sbr.rel (0) target = $region5
    $region4: #{adversarial_network_forward.1} parent=1 // pred_region
      _
    $region5: #{adversarial_network_forward.1} parent=1 // pred_fallthru
      _
    // Predicated region
    $region6: #{adversarial_network_forward.1} parent=1 // pred_check
      _
    $region7: #{adversarial_network_forward.1} parent=1 // pred_check_branch
      %19 = sbr.rel (0) target = $region9
    $region8: #{adversarial_network_forward.1} parent=1 // pred_region
      %s21 = ssub.s32 512, 512
      %22 = vsyncadd [#allocation4], %s21
      %s23 = sshll.u32 [#allocation3], 4
      %s24 = int_to_ptr.vmem [resolvable:$true] %s23
      %29 = dma.hbm_to_vmem [thread:$0]  %s1, 512, %s24, [#allocation4], 128, 128, 8
    $region9: #{adversarial_network_forward.1} parent=1 // pred_fallthru
      _
    // Predicated region
    $region10: #{adversarial_network_forward.1} parent=1 // pred_check
      _
    $region11: #{adversarial_network_forward.1} parent=1 // pred_check_branch
      %31 = sbr.rel (0) target = $region13
    $region12: #{adversarial_network_forward.1} parent=1 // pred_region
      %s33 = ssub.s32 16, 16
      %34 = vsyncadd [#allocation6], %s33
      %s36 = sshll.u32 [#allocation5], 4
      %s37 = int_to_ptr.vmem [resolvable:$true] %s36
      %39 = dma.hbm_to_vmem [thread:$0]  %s2, 16, %s37, [#allocation6]
    $region13: #{adversarial_network_forward.1} parent=1 // pred_fallthru
      _
    // Predicated region
    $region14: #{adversarial_network_forward.1} parent=1 // pred_check
      _
    $region15: #{adversarial_network_forward.1} parent=1 // pred_check_branch
      %41 = sbr.rel (0) target = $region17
    $region16: #{adversarial_network_forward.1} parent=1 // pred_region
      _
    $region17: #{adversarial_network_forward.1} parent=1 // pred_fallthru
      _
    // Predicated region
    $region18: #{adversarial_network_forward.1} parent=1 // pred_check
      _
    $region19: #{adversarial_network_forward.1} parent=1 // pred_check_branch
      %43 = sbr.rel (0) target = $region21
    $region20: #{adversarial_network_forward.1} parent=1 // pred_region
      _
    $region21: #{adversarial_network_forward.1} parent=1 // pred_fallthru
      _
    // Predicated region
    $region22: #{adversarial_network_forward.1} parent=1 // pred_check
      _
    $region23: #{adversarial_network_forward.1} parent=1 // pred_check_branch
      %45 = sbr.rel (0) target = $region25
    $region24: #{adversarial_network_forward.1} parent=1 // pred_region
      _
    $region25: #{adversarial_network_forward.1} parent=1 // pred_fallthru
      _
    // Predicated region
    $region26: #{adversarial_network_forward.1} parent=1 // pred_check
      _
    $region27: #{adversarial_network_forward.1} parent=1 // pred_check_branch
      %47 = sbr.rel (0) target = $region29
    $region28: #{adversarial_network_forward.1} parent=1 // pred_region
      _
    $region29: #{adversarial_network_forward.1} parent=1 // pred_fallthru
      _
    // Predicated region
    $region30: #{adversarial_network_forward.1} parent=1 // pred_check
      _
    $region31: #{adversarial_network_forward.1} parent=1 // pred_check_branch
      %49 = sbr.rel (0) target = $region33
    $region32: #{adversarial_network_forward.1} parent=1 // pred_region
      %50 = dma.done [#allocation4], 512
    $region33: #{adversarial_network_forward.1} parent=1 // pred_fallthru
      _
    // Predicated region
    $region34: #{adversarial_network_forward.1} parent=1 // pred_check
      _
    $region35: #{adversarial_network_forward.1} parent=1 // pred_check_branch
      %52 = sbr.rel (0) target = $region37
    $region36: #{adversarial_network_forward.1} parent=1 // pred_region
      %53 = dma.done [#allocation6], 16
    $region37: #{adversarial_network_forward.1} parent=1 // pred_fallthru
      _
    %v54 = vld [vmem:[%s0] sm:$0xff]
    %v55 = vld [vmem:[#allocation3] sm:$0xff]
    %v56 = vld [vmem:[#allocation3 + $0x8] sm:$0xff]
    %v57 = vld [vmem:[#allocation3 + $0x10] sm:$0xff]
    %v58 = vld [vmem:[#allocation3 + $0x18] sm:$0xff]
    %v59 = vld [vmem:[#allocation5] sm:$0x1]
    %v61 = vlaneseq
    %v62 = vshrl.u32 %v61, 7
    %v63 = vsub.s32 0, %v62
    %v64 = vrot.slane %v59, %v63
    %vm66 = vcmask 261120
    %v68 = vsel %vm66, %v54, 0
    %70 = vmatprep.subr.mxu0 0.0
    %71 = vmatpush1.msra.mxu0 0.0
    %72 = vmatprep.subr.mxu0 0.0
    %73 = vmatpush1.msra.mxu0 0.0
    %74 = vmatprep.subr.mxu0 0.0
    %75 = vmatpush1.msra.mxu0 0.0
    %76 = vmatprep.subr.mxu0 0.0
    %77 = vmatpush1.msra.mxu0 0.0
    %78 = vmatprep.subr.mxu0 0.0
    %79 = vmatpush1.msra.mxu0 0.0
    %80 = vmatprep.subr.mxu0 0.0
    %81 = vmatpush1.msra.mxu0 0.0
    %82 = vmatprep.subr.mxu0 0.0
    %83 = vmatpush1.msra.mxu0 0.0
    %84 = vmatprep.subr.mxu0 0.0
    %85 = vmatpush1.msra.mxu0 0.0
    %86 = vmatprep.subr.mxu0 0.0
    %87 = vmatpush1.msra.mxu0 0.0
    %88 = vmatprep.subr.mxu0 0.0
    %89 = vmatpush1.msra.mxu0 0.0
    %90 = vmatprep.subr.mxu0 0.0
    %91 = vmatpush1.msra.mxu0 0.0
    %92 = vmatprep.subr.mxu0 0.0
    %93 = vmatpush1.msra.mxu0 0.0
    %94 = vmatprep.subr.mxu0 0.0
    %95 = vmatpush1.msra.mxu0 %v58
    %96 = vmatprep.subr.mxu0 0.0
    %97 = vmatpush1.msra.mxu0 %v57
    %98 = vmatprep.subr.mxu0 0.0
    %99 = vmatpush1.msra.mxu0 %v56
    %100 = vmatprep.subr.mxu0 0.0
    %101 = vmatpush1.msra.mxu0 %v55
    %102 = vmatprep.subr.mxu0 0.0
    %103 = vmatpush2.msra.mxu0 0.0
    %104 = vmatprep.subr.mxu0 0.0
    %105 = vmatpush2.msra.mxu0 0.0
    %106 = vmatprep.subr.mxu0 0.0
    %107 = vmatpush2.msra.mxu0 0.0
    %108 = vmatprep.subr.mxu0 0.0
    %109 = vmatpush2.msra.mxu0 0.0
    %110 = vmatprep.subr.mxu0 0.0
    %111 = vmatpush2.msra.mxu0 0.0
    %112 = vmatprep.subr.mxu0 0.0
    %113 = vmatpush2.msra.mxu0 0.0
    %114 = vmatprep.subr.mxu0 0.0
    %115 = vmatpush2.msra.mxu0 0.0
    %116 = vmatprep.subr.mxu0 0.0
    %117 = vmatpush2.msra.mxu0 0.0
    %118 = vmatprep.subr.mxu0 0.0
    %119 = vmatpush2.msra.mxu0 0.0
    %120 = vmatprep.subr.mxu0 0.0
    %121 = vmatpush2.msra.mxu0 0.0
    %122 = vmatprep.subr.mxu0 0.0
    %123 = vmatpush2.msra.mxu0 0.0
    %124 = vmatprep.subr.mxu0 0.0
    %125 = vmatpush2.msra.mxu0 0.0
    %126 = vmatprep.subr.mxu0 0.0
    %127 = vmatpush2.msra.mxu0 0.0
    %128 = vmatprep.subr.mxu0 0.0
    %129 = vmatpush2.msra.mxu0 0.0
    %130 = vmatprep.subr.mxu0 0.0
    %131 = vmatpush2.msra.mxu0 0.0
    %132 = vmatprep.subr.mxu0 0.0
    %133 = vmatpush2.msra.mxu0 0.0
    %134 = vmatprep.mubr.f32.mxu0 0.0
    %135 = vmatmul.mubr.f32.gmra.mxu0 %v68
    %v136 = vpop.f32.mrf.mxu0
    %v137 = vadd.f32 %v64, %v136
    %v138 = vpop.f32.mrf.mxu0
    %139 = vdwg.mxu0
    %v140 = vmax.f32 %v137, 0.0
    %v141 = vld [vmem:[%s3] sm:$0xff]
    %v142 = vld [vmem:[%s3 + $0x8] sm:$0xff]
    %v143 = vld [vmem:[%s3 + $0x10] sm:$0xff]
    %v144 = vld [vmem:[%s3 + $0x18] sm:$0xff]
    %v145 = vld [vmem:[%s3 + $0x20] sm:$0xff]
    %v146 = vld [vmem:[%s3 + $0x28] sm:$0xff]
    %v147 = vld [vmem:[%s3 + $0x30] sm:$0xff]
    %v148 = vld [vmem:[%s3 + $0x38] sm:$0xff]
    %v149 = vld [vmem:[%s3 + $0x40] sm:$0xff]
    %v150 = vld [vmem:[%s3 + $0x48] sm:$0xff]
    %v151 = vld [vmem:[%s3 + $0x50] sm:$0xff]
    %v152 = vld [vmem:[%s3 + $0x58] sm:$0xff]
    %v153 = vld [vmem:[%s3 + $0x60] sm:$0xff]
    %v154 = vld [vmem:[%s3 + $0x68] sm:$0xff]
    %v155 = vld [vmem:[%s3 + $0x70] sm:$0xff]
    %v156 = vld [vmem:[%s3 + $0x78] sm:$0xff]
    %v157 = vld [vmem:[%s4] sm:$0x1]
    %v159 = vlaneseq
    %v160 = vshrl.u32 %v159, 7
    %v161 = vsub.s32 0, %v160
    %v162 = vrot.slane %v157, %v161
    %164 = vmatprep.subr.mxu0 0.0
    %165 = vmatpush1.msra.mxu0 %v156
    %166 = vmatprep.subr.mxu0 0.0
    %167 = vmatpush1.msra.mxu0 %v155
    %168 = vmatprep.subr.mxu0 0.0
    %169 = vmatpush1.msra.mxu0 %v154
    %170 = vmatprep.subr.mxu0 0.0
    %171 = vmatpush1.msra.mxu0 %v153
    %172 = vmatprep.subr.mxu0 0.0
    %173 = vmatpush1.msra.mxu0 %v152
    %174 = vmatprep.subr.mxu0 0.0
    %175 = vmatpush1.msra.mxu0 %v151
    %176 = vmatprep.subr.mxu0 0.0
    %177 = vmatpush1.msra.mxu0 %v150
    %178 = vmatprep.subr.mxu0 0.0
    %179 = vmatpush1.msra.mxu0 %v149
    %180 = vmatprep.subr.mxu0 0.0
    %181 = vmatpush1.msra.mxu0 %v148
    %182 = vmatprep.subr.mxu0 0.0
    %183 = vmatpush1.msra.mxu0 %v147
    %184 = vmatprep.subr.mxu0 0.0
    %185 = vmatpush1.msra.mxu0 %v146
    %186 = vmatprep.subr.mxu0 0.0
    %187 = vmatpush1.msra.mxu0 %v145
    %188 = vmatprep.subr.mxu0 0.0
    %189 = vmatpush1.msra.mxu0 %v144
    %190 = vmatprep.subr.mxu0 0.0
    %191 = vmatpush1.msra.mxu0 %v143
    %192 = vmatprep.subr.mxu0 0.0
    %193 = vmatpush1.msra.mxu0 %v142
    %194 = vmatprep.subr.mxu0 0.0
    %195 = vmatpush1.msra.mxu0 %v141
    %196 = vmatprep.subr.mxu0 0.0
    %197 = vmatpush2.msra.mxu0 0.0
    %198 = vmatprep.subr.mxu0 0.0
    %199 = vmatpush2.msra.mxu0 0.0
    %200 = vmatprep.subr.mxu0 0.0
    %201 = vmatpush2.msra.mxu0 0.0
    %202 = vmatprep.subr.mxu0 0.0
    %203 = vmatpush2.msra.mxu0 0.0
    %204 = vmatprep.subr.mxu0 0.0
    %205 = vmatpush2.msra.mxu0 0.0
    %206 = vmatprep.subr.mxu0 0.0
    %207 = vmatpush2.msra.mxu0 0.0
    %208 = vmatprep.subr.mxu0 0.0
    %209 = vmatpush2.msra.mxu0 0.0
    %210 = vmatprep.subr.mxu0 0.0
    %211 = vmatpush2.msra.mxu0 0.0
    %212 = vmatprep.subr.mxu0 0.0
    %213 = vmatpush2.msra.mxu0 0.0
    %214 = vmatprep.subr.mxu0 0.0
    %215 = vmatpush2.msra.mxu0 0.0
    %216 = vmatprep.subr.mxu0 0.0
    %217 = vmatpush2.msra.mxu0 0.0
    %218 = vmatprep.subr.mxu0 0.0
    %219 = vmatpush2.msra.mxu0 0.0
    %220 = vmatprep.subr.mxu0 0.0
    %221 = vmatpush2.msra.mxu0 0.0
    %222 = vmatprep.subr.mxu0 0.0
    %223 = vmatpush2.msra.mxu0 0.0
    %224 = vmatprep.subr.mxu0 0.0
    %225 = vmatpush2.msra.mxu0 0.0
    %226 = vmatprep.subr.mxu0 0.0
    %227 = vmatpush2.msra.mxu0 0.0
    %228 = vmatprep.mubr.f32.mxu0 0.0
    %229 = vmatmul.mubr.f32.gmra.mxu0 %v140
    %v230 = vpop.f32.mrf.mxu0
    %v231 = vadd.f32 %v162, %v230
    %v232 = vpop.f32.mrf.mxu0
    %233 = vdwg.mxu0
    %v234 = vmax.f32 %v231, 0.0
    %v235 = vld [vmem:[%s5] sm:$0xff]
    %v236 = vld [vmem:[%s5 + $0x8] sm:$0xff]
    %v237 = vld [vmem:[%s5 + $0x10] sm:$0xff]
    %v238 = vld [vmem:[%s5 + $0x18] sm:$0xff]
    %v239 = vld [vmem:[%s5 + $0x20] sm:$0xff]
    %v240 = vld [vmem:[%s5 + $0x28] sm:$0xff]
    %v241 = vld [vmem:[%s5 + $0x30] sm:$0xff]
    %v242 = vld [vmem:[%s5 + $0x38] sm:$0xff]
    %v243 = vld [vmem:[%s5 + $0x40] sm:$0xff]
    %v244 = vld [vmem:[%s5 + $0x48] sm:$0xff]
    %v245 = vld [vmem:[%s5 + $0x50] sm:$0xff]
    %v246 = vld [vmem:[%s5 + $0x58] sm:$0xff]
    %v247 = vld [vmem:[%s5 + $0x60] sm:$0xff]
    %v248 = vld [vmem:[%s5 + $0x68] sm:$0xff]
    %v249 = vld [vmem:[%s5 + $0x70] sm:$0xff]
    %v250 = vld [vmem:[%s5 + $0x78] sm:$0xff]
    %v251 = vld [vmem:[#allocation2] sm:$0x1]
    %v253 = vlaneseq
    %v254 = vshrl.u32 %v253, 7
    %v255 = vsub.s32 0, %v254
    %v256 = vrot.slane %v251, %v255
    %258 = vmatprep.subr.mxu0 0.0
    %259 = vmatpush1.msra.mxu0 %v250
    %260 = vmatprep.subr.mxu0 0.0
    %261 = vmatpush1.msra.mxu0 %v249
    %262 = vmatprep.subr.mxu0 0.0
    %263 = vmatpush1.msra.mxu0 %v248
    %264 = vmatprep.subr.mxu0 0.0
    %265 = vmatpush1.msra.mxu0 %v247
    %266 = vmatprep.subr.mxu0 0.0
    %267 = vmatpush1.msra.mxu0 %v246
    %268 = vmatprep.subr.mxu0 0.0
    %269 = vmatpush1.msra.mxu0 %v245
    %270 = vmatprep.subr.mxu0 0.0
    %271 = vmatpush1.msra.mxu0 %v244
    %272 = vmatprep.subr.mxu0 0.0
    %273 = vmatpush1.msra.mxu0 %v243
    %274 = vmatprep.subr.mxu0 0.0
    %275 = vmatpush1.msra.mxu0 %v242
    %276 = vmatprep.subr.mxu0 0.0
    %277 = vmatpush1.msra.mxu0 %v241
    %278 = vmatprep.subr.mxu0 0.0
    %279 = vmatpush1.msra.mxu0 %v240
    %280 = vmatprep.subr.mxu0 0.0
    %281 = vmatpush1.msra.mxu0 %v239
    %282 = vmatprep.subr.mxu0 0.0
    %283 = vmatpush1.msra.mxu0 %v238
    %284 = vmatprep.subr.mxu0 0.0
    %285 = vmatpush1.msra.mxu0 %v237
    %286 = vmatprep.subr.mxu0 0.0
    %287 = vmatpush1.msra.mxu0 %v236
    %288 = vmatprep.subr.mxu0 0.0
    %289 = vmatpush1.msra.mxu0 %v235
    %290 = vmatprep.subr.mxu0 0.0
    %291 = vmatpush2.msra.mxu0 0.0
    %292 = vmatprep.subr.mxu0 0.0
    %293 = vmatpush2.msra.mxu0 0.0
    %294 = vmatprep.subr.mxu0 0.0
    %295 = vmatpush2.msra.mxu0 0.0
    %296 = vmatprep.subr.mxu0 0.0
    %297 = vmatpush2.msra.mxu0 0.0
    %298 = vmatprep.subr.mxu0 0.0
    %299 = vmatpush2.msra.mxu0 0.0
    %300 = vmatprep.subr.mxu0 0.0
    %301 = vmatpush2.msra.mxu0 0.0
    %302 = vmatprep.subr.mxu0 0.0
    %303 = vmatpush2.msra.mxu0 0.0
    %304 = vmatprep.subr.mxu0 0.0
    %305 = vmatpush2.msra.mxu0 0.0
    %306 = vmatprep.subr.mxu0 0.0
    %307 = vmatpush2.msra.mxu0 0.0
    %308 = vmatprep.subr.mxu0 0.0
    %309 = vmatpush2.msra.mxu0 0.0
    %310 = vmatprep.subr.mxu0 0.0
    %311 = vmatpush2.msra.mxu0 0.0
    %312 = vmatprep.subr.mxu0 0.0
    %313 = vmatpush2.msra.mxu0 0.0
    %314 = vmatprep.subr.mxu0 0.0
    %315 = vmatpush2.msra.mxu0 0.0
    %316 = vmatprep.subr.mxu0 0.0
    %317 = vmatpush2.msra.mxu0 0.0
    %318 = vmatprep.subr.mxu0 0.0
    %319 = vmatpush2.msra.mxu0 0.0
    %320 = vmatprep.subr.mxu0 0.0
    %321 = vmatpush2.msra.mxu0 0.0
    %322 = vmatprep.mubr.f32.mxu0 0.0
    %323 = vmatmul.mubr.f32.gmra.mxu0 %v234
    %v324 = vpop.f32.mrf.mxu0
    %v325 = vadd.f32 %v256, %v324
    %v326 = vpop.f32.mrf.mxu0
    %327 = vdwg.mxu0
    %vm328 = vcmask 7168
    %329 = vst.msk [vmem:[%s7] sm:$0xff] %vm328, %v325
    // Predicated region
    $region38: #{adversarial_network_forward.1} parent=1 // pred_check
      _
    $region39: #{adversarial_network_forward.1} parent=1 // pred_check_branch
      %331 = sbr.rel (0) target = $region41
    $region40: #{adversarial_network_forward.1} parent=1 // pred_region
      _
    $region41: #{adversarial_network_forward.1} parent=1 // pred_fallthru
      _
    // Predicated region
    $region42: #{adversarial_network_forward.1} parent=1 // pred_check
      _
    $region43: #{adversarial_network_forward.1} parent=1 // pred_check_branch
      %333 = sbr.rel (0) target = $region45
    $region44: #{adversarial_network_forward.1} parent=1 // pred_region
      _
    $region45: #{adversarial_network_forward.1} parent=1 // pred_fallthru
      _
    %334 = vsyncpa [#allocation4], 1
    %335 = vsyncpa [#allocation6], 1

</llo_original>
